<compile_context>
chip_gen: v7x
topology: tpu7x:2x2x1
jax: 0.10.0
libtpu: 0.0.40
codegen_flags: <defaults>
</compile_context>

<pallas_src>
import functools

import jax
import jax.numpy as jnp
from jax.experimental import pallas as pl
from jax.experimental.pallas import tpu as pltpu


def _round_up(n, m):
    return (n + m - 1) // m * m


def vanet_kernel(x_ref, w1_ref, b1_ref, wav_ref, bav_ref, out_ref, *, action_dim):
    # Shared trunk: fc1 + ReLU (computed once; A and V heads both consume it).
    h = jnp.dot(x_ref[...], w1_ref[...], preferred_element_type=jnp.float32)
    h = jnp.maximum(h + b1_ref[...], 0.0)

    # Fused A/V heads: one lane-dense matmul. Columns [0, action_dim) = A head,
    # column `action_dim` = V head, remaining columns are zero-padded.
    av = jnp.dot(h, wav_ref[...], preferred_element_type=jnp.float32) + bav_ref[...]

    lane = jax.lax.broadcasted_iota(jnp.int32, av.shape, 1)
    a_mask = lane < action_dim
    v_mask = lane == action_dim

    # mean(A) over the real action lanes; V extracted from its lane (XLU reductions,
    # off the VALU critical path).
    a_sum = jnp.sum(jnp.where(a_mask, av, 0.0), axis=-1, keepdims=True)
    v = jnp.sum(jnp.where(v_mask, av, 0.0), axis=-1, keepdims=True)
    a_mean = a_sum * (1.0 / float(action_dim))

    # Q = V + A - mean(A).  Padding lanes get harmless values; the wrapper slices
    # [:, :action_dim], so no extra masking/select is spent on them.
    out_ref[...] = (av + v - a_mean).astype(out_ref.dtype)


@jax.jit
def vanet_forward(x, w1, b1, w_a, b_a, w_v, b_v):
    batch, state_dim = x.shape
    hidden2 = w1.shape[1]          # hidden_dim * 2
    action_dim = w_a.shape[1]

    # Padded, MXU/lane-friendly dims.
    k_pad = _round_up(state_dim, 128)
    h_pad = _round_up(hidden2, 128)
    n_pad = _round_up(action_dim + 1, 128)   # A lanes + 1 V lane, lane-dense output

    # Batch tile: largest of {<=512} that is a multiple of 8; pad batch up to it.
    tm = min(512, _round_up(batch, 8))
    batch_pad = _round_up(batch, tm)

    f32 = jnp.float32
    # NOTE: in a real training loop the padded weight slabs below should be built once,
    # outside the per-step forward; here they are tiny so we pad inline.
    x_p = jnp.zeros((batch_pad, k_pad), f32).at[:batch, :state_dim].set(x)
    w1_p = jnp.zeros((k_pad, h_pad), f32).at[:state_dim, :hidden2].set(w1)
    b1_p = jnp.zeros((1, h_pad), f32).at[:, :hidden2].set(b1)

    w_av = jnp.zeros((h_pad, n_pad), f32)
    w_av = w_av.at[:hidden2, :action_dim].set(w_a)
    w_av = w_av.at[:hidden2, action_dim].set(w_v[:, 0])
    b_av = jnp.zeros((1, n_pad), f32)
    b_av = b_av.at[:, :action_dim].set(b_a)
    b_av = b_av.at[:, action_dim].set(b_v[0, 0])

    flops = 2 * batch_pad * (k_pad * h_pad + h_pad * n_pad)
    bytes_accessed = 4 * (batch_pad * k_pad + k_pad * h_pad + h_pad * n_pad
                          + batch_pad * n_pad + h_pad + n_pad)

    out_padded = pl.pallas_call(
        functools.partial(vanet_kernel, action_dim=action_dim),
        out_shape=jax.ShapeDtypeStruct((batch_pad, n_pad), f32),
        grid_spec=pltpu.PrefetchScalarGridSpec(
            num_scalar_prefetch=0,
            grid=(batch_pad // tm,),
            in_specs=[
                pl.BlockSpec((tm, k_pad), lambda i: (i, 0)),     # x tile (pipelined)
                pl.BlockSpec((k_pad, h_pad), lambda i: (0, 0)),  # w1 (VMEM-resident)
                pl.BlockSpec((1, h_pad), lambda i: (0, 0)),      # b1 (VMEM-resident)
                pl.BlockSpec((h_pad, n_pad), lambda i: (0, 0)),  # fused A/V weights
                pl.BlockSpec((1, n_pad), lambda i: (0, 0)),      # fused A/V bias
            ],
            out_specs=pl.BlockSpec((tm, n_pad), lambda i: (i, 0)),
        ),
        compiler_params=pltpu.CompilerParams(
            dimension_semantics=("parallel",)),
        cost_estimate=pl.CostEstimate(
            flops=flops, transcendentals=0, bytes_accessed=bytes_accessed),
    )(x_p, w1_p, b1_p, w_av, b_av)

    return out_padded[:batch, :action_dim]


def init_linear_params(key, in_features, out_features):
    """Mimics torch.nn.Linear default init U(-1/sqrt(fan_in), 1/sqrt(fan_in)).
    Weight is returned already transposed to (in_features, out_features)."""
    kw, kb = jax.random.split(key)
    bound = 1.0 / jnp.sqrt(jnp.float32(in_features))
    w = jax.random.uniform(kw, (in_features, out_features), jnp.float32, -bound, bound)
    b = jax.random.uniform(kb, (1, out_features), jnp.float32, -bound, bound)
    return w, b


def vanet_reference(x, w1, b1, w_a, b_a, w_v, b_v):
    h = jnp.maximum(x @ w1 + b1, 0.0)
    a = h @ w_a + b_a
    v = h @ w_v + b_v
    return v + a - a.mean(axis=1, keepdims=True)


if __name__ == "__main__":
    # Small shapes consistent with the module: batch=2, state_dim=4, hidden_dim=32, action_dim=2.
    batch, state_dim, hidden_dim, action_dim = 2, 4, 32, 2

    key = jax.random.PRNGKey(0)
    kx, k1, ka, kv, kx2 = jax.random.split(key, 5)

    x = jax.random.normal(kx, (batch, state_dim), jnp.float32)
    w1, b1 = init_linear_params(k1, state_dim, hidden_dim * 2)        # fc1
    w_a, b_a = init_linear_params(ka, hidden_dim * 2, action_dim)     # fc_A
    w_v, b_v = init_linear_params(kv, hidden_dim * 2, 1)              # fc_V

    out = vanet_forward(x, w1, b1, w_a, b_a, w_v, b_v)
    out = jax.block_until_ready(out)
    ref = vanet_reference(x, w1, b1, w_a, b_a, w_v, b_v)
    assert out.shape == (batch, action_dim)
    assert jnp.allclose(out, ref, atol=1e-4, rtol=1e-4)

    # Also exercise the multi-tile batch grid path (grid > 1, resident weights).
    big_batch = 1024
    xb = jax.random.normal(kx2, (big_batch, state_dim), jnp.float32)
    out_b = jax.block_until_ready(vanet_forward(xb, w1, b1, w_a, b_a, w_v, b_v))
    ref_b = vanet_reference(xb, w1, b1, w_a, b_a, w_v, b_v)
    assert out_b.shape == (big_batch, action_dim)
    assert jnp.allclose(out_b, ref_b, atol=1e-4, rtol=1e-4)

    print("KERNEL_OK")
</pallas_src>

<mosaic_0001>
module attributes {stable_mosaic.version = 11 : i64} {
  func.func @vanet_kernel(%arg0: i32, %arg1: memref<8x128xf32, #tpu.memory_space<vmem>>, %arg2: memref<128x128xf32, #tpu.memory_space<vmem>>, %arg3: memref<1x128xf32, #tpu.memory_space<vmem>>, %arg4: memref<128x128xf32, #tpu.memory_space<vmem>>, %arg5: memref<1x128xf32, #tpu.memory_space<vmem>>, %arg6: memref<8x128xf32, #tpu.memory_space<vmem>>) attributes {dimension_semantics = [#tpu.dimension_semantics<parallel>], iteration_bounds = array<i64: 1>, scalar_prefetch = 0 : i64, scratch_operands = 0 : i64, tpu.core_type = #tpu.core_type<tc>, window_params = [{transform_indices = @transform_0, window_bounds = array<i64: 8, 128>}, {pipeline_mode = #tpu.pipeline_mode<synchronous>, transform_indices = @transform_1, window_bounds = array<i64: 128, 128>}, {pipeline_mode = #tpu.pipeline_mode<synchronous>, transform_indices = @transform_2, window_bounds = array<i64: 1, 128>}, {pipeline_mode = #tpu.pipeline_mode<synchronous>, transform_indices = @transform_3, window_bounds = array<i64: 128, 128>}, {pipeline_mode = #tpu.pipeline_mode<synchronous>, transform_indices = @transform_4, window_bounds = array<i64: 1, 128>}, {transform_indices = @transform_5, window_bounds = array<i64: 8, 128>}]} {
    %c0 = arith.constant 0 : index
    %c0_0 = arith.constant 0 : index
    %0 = vector.load %arg1[%c0, %c0_0] : memref<8x128xf32, #tpu.memory_space<vmem>>, vector<8x128xf32>
    %c0_1 = arith.constant 0 : index
    %c0_2 = arith.constant 0 : index
    %1 = vector.load %arg2[%c0_1, %c0_2] : memref<128x128xf32, #tpu.memory_space<vmem>>, vector<128x128xf32>
    %cst = arith.constant dense<0.000000e+00> : vector<8x128xf32>
    %2 = tpu.matmul %0, %1, %cst {dimension_numbers = #tpu.dot_dimension_numbers<[1], [0], [0], [1], [0, 0, 1, 1], [], []>} : vector<8x128xf32>, vector<128x128xf32>, vector<8x128xf32> -> vector<8x128xf32>
    %c0_3 = arith.constant 0 : index
    %c0_4 = arith.constant 0 : index
    %3 = vector.load %arg3[%c0_3, %c0_4] : memref<1x128xf32, #tpu.memory_space<vmem>>, vector<1x128xf32>
    %4 = vector.broadcast %3 : vector<1x128xf32> to vector<8x128xf32>
    %5 = arith.addf %2, %4 : vector<8x128xf32>
    %cst_5 = arith.constant 0.000000e+00 : f32
    %6 = vector.broadcast %cst_5 : f32 to vector<8x128xf32>
    %7 = arith.maximumf %5, %6 : vector<8x128xf32>
    %c0_6 = arith.constant 0 : index
    %c0_7 = arith.constant 0 : index
    %8 = vector.load %arg4[%c0_6, %c0_7] : memref<128x128xf32, #tpu.memory_space<vmem>>, vector<128x128xf32>
    %cst_8 = arith.constant dense<0.000000e+00> : vector<8x128xf32>
    %9 = tpu.matmul %7, %8, %cst_8 {dimension_numbers = #tpu.dot_dimension_numbers<[1], [0], [0], [1], [0, 0, 1, 1], [], []>} : vector<8x128xf32>, vector<128x128xf32>, vector<8x128xf32> -> vector<8x128xf32>
    %c0_9 = arith.constant 0 : index
    %c0_10 = arith.constant 0 : index
    %10 = vector.load %arg5[%c0_9, %c0_10] : memref<1x128xf32, #tpu.memory_space<vmem>>, vector<1x128xf32>
    %11 = vector.broadcast %10 : vector<1x128xf32> to vector<8x128xf32>
    %12 = arith.addf %9, %11 : vector<8x128xf32>
    %13 = tpu.iota {dimensions = array<i32: 1>} : vector<8x128xi32>
    %c2_i32 = arith.constant 2 : i32
    %14 = vector.broadcast %c2_i32 : i32 to vector<8x128xi32>
    %15 = arith.cmpi slt, %13, %14 : vector<8x128xi32>
    %c2_i32_11 = arith.constant 2 : i32
    %16 = vector.broadcast %c2_i32_11 : i32 to vector<8x128xi32>
    %17 = arith.cmpi eq, %13, %16 : vector<8x128xi32>
    %cst_12 = arith.constant 0.000000e+00 : f32
    %18 = vector.broadcast %cst_12 : f32 to vector<8x128xf32>
    %19 = arith.select %15, %12, %18 : vector<8x128xi1>, vector<8x128xf32>
    %cst_13 = arith.constant dense<0.000000e+00> : vector<8xf32>
    %20 = vector.multi_reduction <add>, %19, %cst_13 [1] : vector<8x128xf32> to vector<8xf32>
    %21 = vector.shape_cast %20 : vector<8xf32> to vector<8x1xf32>
    %cst_14 = arith.constant 0.000000e+00 : f32
    %22 = vector.broadcast %cst_14 : f32 to vector<8x128xf32>
    %23 = arith.select %17, %12, %22 : vector<8x128xi1>, vector<8x128xf32>
    %cst_15 = arith.constant dense<0.000000e+00> : vector<8xf32>
    %24 = vector.multi_reduction <add>, %23, %cst_15 [1] : vector<8x128xf32> to vector<8xf32>
    %25 = vector.shape_cast %24 : vector<8xf32> to vector<8x1xf32>
    %cst_16 = arith.constant 5.000000e-01 : f32
    %26 = vector.broadcast %cst_16 : f32 to vector<8x1xf32>
    %27 = arith.mulf %21, %26 : vector<8x1xf32>
    %28 = vector.broadcast %25 : vector<8x1xf32> to vector<8x128xf32>
    %29 = arith.addf %12, %28 : vector<8x128xf32>
    %30 = vector.broadcast %27 : vector<8x1xf32> to vector<8x128xf32>
    %31 = arith.subf %29, %30 : vector<8x128xf32>
    %c0_17 = arith.constant 0 : index
    %c0_18 = arith.constant 0 : index
    %32 = vector.load %arg6[%c0_17, %c0_18] : memref<8x128xf32, #tpu.memory_space<vmem>>, vector<8x128xf32>
    tpu.vector_store %arg6[%c0_17, %c0_18], %31 {strides = array<i32>} : memref<8x128xf32, #tpu.memory_space<vmem>>, vector<8x128xf32>,
    return
  }
  func.func @transform_0(%arg0: i32) -> (i32, i32) {
    %c0_i32 = arith.constant 0 : i32
    %c0_i32_0 = arith.constant 0 : i32
    return %arg0, %c0_i32 : i32, i32
  }
  func.func @transform_1(%arg0: i32) -> (i32, i32) {
    %c0_i32 = arith.constant 0 : i32
    %c0_i32_0 = arith.constant 0 : i32
    %c0_i32_1 = arith.constant 0 : i32
    return %c0_i32, %c0_i32_0 : i32, i32
  }
  func.func @transform_2(%arg0: i32) -> (i32, i32) {
    %c0_i32 = arith.constant 0 : i32
    %c0_i32_0 = arith.constant 0 : i32
    %c0_i32_1 = arith.constant 0 : i32
    return %c0_i32, %c0_i32_0 : i32, i32
  }
  func.func @transform_3(%arg0: i32) -> (i32, i32) {
    %c0_i32 = arith.constant 0 : i32
    %c0_i32_0 = arith.constant 0 : i32
    %c0_i32_1 = arith.constant 0 : i32
    return %c0_i32, %c0_i32_0 : i32, i32
  }
  func.func @transform_4(%arg0: i32) -> (i32, i32) {
    %c0_i32 = arith.constant 0 : i32
    %c0_i32_0 = arith.constant 0 : i32
    %c0_i32_1 = arith.constant 0 : i32
    return %c0_i32, %c0_i32_0 : i32, i32
  }
  func.func @transform_5(%arg0: i32) -> (i32, i32) {
    %c0_i32 = arith.constant 0 : i32
    %c0_i32_0 = arith.constant 0 : i32
    return %arg0, %c0_i32 : i32, i32
  }
}

</mosaic_0001>

<llo_original>
// kernel: vanet_forward.1
$region0: #{vanet_forward.1}
  #allocation0 [shape = 'u32[]', space=smem, size = 0x4, offset = 0x4, fixed_abs, tag = 'smem constant byte address 0x4 - core index']
  #allocation1 [shape = 'u32[144,128]{1,0:T(1,128)}', space=vmem, size = 0x12000, scoped, tag = 'internal scratch']
  %s0 = inlined_call_operand.vmem [shape: f32[8,128], index: 0, kind: input, shape index: {}]
  %s1 = inlined_call_operand.vmem [shape: f32[128,128], index: 1, kind: input, shape index: {}]
  %s2 = inlined_call_operand.vmem [shape: f32[1,128], index: 2, kind: input, shape index: {}]
  %s3 = inlined_call_operand.vmem [shape: f32[128,128], index: 3, kind: input, shape index: {}]
  %s4 = inlined_call_operand.vmem [shape: f32[1,128], index: 4, kind: input, shape index: {}]
  %s5 = inlined_call_operand.vmem [shape: f32[8,128], index: 5, kind: output, shape index: {}]
  %s6 = sld [smem:[#allocation0]]
  $region30: #{vanet_forward.1} parent=0
    _
  %s8 = ssub.s32 1, %s6
  %s9 = scalar_select 0, %s8, %s6
  // Predicated region
  $region2: #{vanet_forward.1} parent=0 // pred_check
    _
  $region3: #{vanet_forward.1} parent=0 // pred_check_branch
    %11 = sbr.rel (0) target = $region5
  $region4: #{vanet_forward.1} parent=0 // pred_region
    _
  $region5: #{vanet_forward.1} parent=0 // pred_fallthru
    _
  // Predicated region
  $region6: #{vanet_forward.1} parent=0 // pred_check
    _
  $region7: #{vanet_forward.1} parent=0 // pred_check_branch
    %13 = sbr.rel (0) target = $region9
  $region8: #{vanet_forward.1} parent=0 // pred_region
    _
  $region9: #{vanet_forward.1} parent=0 // pred_fallthru
    _
  // Predicated region
  $region10: #{vanet_forward.1} parent=0 // pred_check
    _
  $region11: #{vanet_forward.1} parent=0 // pred_check_branch
    %15 = sbr.rel (0) target = $region13
  $region12: #{vanet_forward.1} parent=0 // pred_region
    _
  $region13: #{vanet_forward.1} parent=0 // pred_fallthru
    _
  // Predicated region
  $region14: #{vanet_forward.1} parent=0 // pred_check
    _
  $region15: #{vanet_forward.1} parent=0 // pred_check_branch
    %17 = sbr.rel (0) target = $region17
  $region16: #{vanet_forward.1} parent=0 // pred_region
    _
  $region17: #{vanet_forward.1} parent=0 // pred_fallthru
    _
  // Predicated region
  $region18: #{vanet_forward.1} parent=0 // pred_check
    _
  $region19: #{vanet_forward.1} parent=0 // pred_check_branch
    %19 = sbr.rel (0) target = $region21
  $region20: #{vanet_forward.1} parent=0 // pred_region
    _
  $region21: #{vanet_forward.1} parent=0 // pred_fallthru
    _
  %v20 = vld [vmem:[%s0] sm:$0xff]
  %v21 = vld [vmem:[%s1] sm:$0xff]
  %v22 = vld [vmem:[%s1 + $0x8] sm:$0xff]
  %v23 = vld [vmem:[%s1 + $0x10] sm:$0xff]
  %v24 = vld [vmem:[%s1 + $0x18] sm:$0xff]
  %v25 = vld [vmem:[%s1 + $0x20] sm:$0xff]
  %v26 = vld [vmem:[%s1 + $0x28] sm:$0xff]
  %v27 = vld [vmem:[%s1 + $0x30] sm:$0xff]
  %v28 = vld [vmem:[%s1 + $0x38] sm:$0xff]
  %v29 = vld [vmem:[%s1 + $0x40] sm:$0xff]
  %v30 = vld [vmem:[%s1 + $0x48] sm:$0xff]
  %v31 = vld [vmem:[%s1 + $0x50] sm:$0xff]
  %v32 = vld [vmem:[%s1 + $0x58] sm:$0xff]
  %v33 = vld [vmem:[%s1 + $0x60] sm:$0xff]
  %v34 = vld [vmem:[%s1 + $0x68] sm:$0xff]
  %v35 = vld [vmem:[%s1 + $0x70] sm:$0xff]
  %v36 = vld [vmem:[%s1 + $0x78] sm:$0xff]
  %v37 = vld [vmem:[%s2] sm:$0x1]
  %v39 = vlaneseq
  %v40 = vshrl.u32 %v39, 7
  %v41 = vsub.s32 0, %v40
  %v42 = vrot.slane %v37, %v41
  %44 = vmatprep.subr.mxu0 0.0
  %45 = vmatpush1.msra.mxu0 %v21
  %46 = vmatprep.subr.mxu0 0.0
  %47 = vmatpush1.msra.mxu0 %v22
  %48 = vmatprep.subr.mxu0 0.0
  %49 = vmatpush1.msra.mxu0 %v23
  %50 = vmatprep.subr.mxu0 0.0
  %51 = vmatpush1.msra.mxu0 %v24
  %52 = vmatprep.subr.mxu0 0.0
  %53 = vmatpush1.msra.mxu0 %v25
  %54 = vmatprep.subr.mxu0 0.0
  %55 = vmatpush1.msra.mxu0 %v26
  %56 = vmatprep.subr.mxu0 0.0
  %57 = vmatpush1.msra.mxu0 %v27
  %58 = vmatprep.subr.mxu0 0.0
  %59 = vmatpush1.msra.mxu0 %v28
  %60 = vmatprep.subr.mxu0 0.0
  %61 = vmatpush1.msra.mxu0 %v29
  %62 = vmatprep.subr.mxu0 0.0
  %63 = vmatpush1.msra.mxu0 %v30
  %64 = vmatprep.subr.mxu0 0.0
  %65 = vmatpush1.msra.mxu0 %v31
  %66 = vmatprep.subr.mxu0 0.0
  %67 = vmatpush1.msra.mxu0 %v32
  %68 = vmatprep.subr.mxu0 0.0
  %69 = vmatpush1.msra.mxu0 %v33
  %70 = vmatprep.subr.mxu0 0.0
  %71 = vmatpush1.msra.mxu0 %v34
  %72 = vmatprep.subr.mxu0 0.0
  %73 = vmatpush1.msra.mxu0 %v35
  %74 = vmatprep.subr.mxu0 0.0
  %75 = vmatpush1.msra.mxu0 %v36
  %76 = vmatprep.subr.mxu0 0.0
  %77 = vmatpush1.msra.mxu0 0.0
  %78 = vmatprep.subr.mxu0 0.0
  %79 = vmatpush1.msra.mxu0 0.0
  %80 = vmatprep.subr.mxu0 0.0
  %81 = vmatpush1.msra.mxu0 0.0
  %82 = vmatprep.subr.mxu0 0.0
  %83 = vmatpush1.msra.mxu0 0.0
  %84 = vmatprep.subr.mxu0 0.0
  %85 = vmatpush1.msra.mxu0 0.0
  %86 = vmatprep.subr.mxu0 0.0
  %87 = vmatpush1.msra.mxu0 0.0
  %88 = vmatprep.subr.mxu0 0.0
  %89 = vmatpush1.msra.mxu0 0.0
  %90 = vmatprep.subr.mxu0 0.0
  %91 = vmatpush1.msra.mxu0 0.0
  %92 = vmatprep.subr.mxu0 0.0
  %93 = vmatpush1.msra.mxu0 0.0
  %94 = vmatprep.subr.mxu0 0.0
  %95 = vmatpush1.msra.mxu0 0.0
  %96 = vmatprep.subr.mxu0 0.0
  %97 = vmatpush1.msra.mxu0 0.0
  %98 = vmatprep.subr.mxu0 0.0
  %99 = vmatpush1.msra.mxu0 0.0
  %100 = vmatprep.subr.mxu0 0.0
  %101 = vmatpush1.msra.mxu0 0.0
  %102 = vmatprep.subr.mxu0 0.0
  %103 = vmatpush1.msra.mxu0 0.0
  %104 = vmatprep.subr.mxu0 0.0
  %105 = vmatpush1.msra.mxu0 0.0
  %106 = vmatprep.subr.mxu0 0.0
  %107 = vmatpush1.msra.mxu0 0.0
  %108 = vmatprep.mubr.f32.mxu0 0.0
  %109 = vmatmul.mubr.f32.gmra.mrb[0].mxu0 %v20
  %v110 = vpop.f32.mrb[0].mxu0
  %v111 = vadd.f32 %v42, %v110
  %v112 = vpop.f32.mrb[0].mxu0
  %113 = vdwg.mxu0
  %v114 = vmax.f32 %v111, 0.0
  %v115 = vld [vmem:[%s3] sm:$0xff]
  %v116 = vld [vmem:[%s3 + $0x8] sm:$0xff]
  %v117 = vld [vmem:[%s3 + $0x10] sm:$0xff]
  %v118 = vld [vmem:[%s3 + $0x18] sm:$0xff]
  %v119 = vld [vmem:[%s3 + $0x20] sm:$0xff]
  %v120 = vld [vmem:[%s3 + $0x28] sm:$0xff]
  %v121 = vld [vmem:[%s3 + $0x30] sm:$0xff]
  %v122 = vld [vmem:[%s3 + $0x38] sm:$0xff]
  %v123 = vld [vmem:[%s3 + $0x40] sm:$0xff]
  %v124 = vld [vmem:[%s3 + $0x48] sm:$0xff]
  %v125 = vld [vmem:[%s3 + $0x50] sm:$0xff]
  %v126 = vld [vmem:[%s3 + $0x58] sm:$0xff]
  %v127 = vld [vmem:[%s3 + $0x60] sm:$0xff]
  %v128 = vld [vmem:[%s3 + $0x68] sm:$0xff]
  %v129 = vld [vmem:[%s3 + $0x70] sm:$0xff]
  %v130 = vld [vmem:[%s3 + $0x78] sm:$0xff]
  %v131 = vld [vmem:[%s4] sm:$0x1]
  %v133 = vlaneseq
  %v134 = vshrl.u32 %v133, 7
  %v135 = vsub.s32 0, %v134
  %v136 = vrot.slane %v131, %v135
  %138 = vmatprep.subr.mxu0 0.0
  %139 = vmatpush1.msra.mxu0 %v115
  %140 = vmatprep.subr.mxu0 0.0
  %141 = vmatpush1.msra.mxu0 %v116
  %142 = vmatprep.subr.mxu0 0.0
  %143 = vmatpush1.msra.mxu0 %v117
  %144 = vmatprep.subr.mxu0 0.0
  %145 = vmatpush1.msra.mxu0 %v118
  %146 = vmatprep.subr.mxu0 0.0
  %147 = vmatpush1.msra.mxu0 %v119
  %148 = vmatprep.subr.mxu0 0.0
  %149 = vmatpush1.msra.mxu0 %v120
  %150 = vmatprep.subr.mxu0 0.0
  %151 = vmatpush1.msra.mxu0 %v121
  %152 = vmatprep.subr.mxu0 0.0
  %153 = vmatpush1.msra.mxu0 %v122
  %154 = vmatprep.subr.mxu0 0.0
  %155 = vmatpush1.msra.mxu0 %v123
  %156 = vmatprep.subr.mxu0 0.0
  %157 = vmatpush1.msra.mxu0 %v124
  %158 = vmatprep.subr.mxu0 0.0
  %159 = vmatpush1.msra.mxu0 %v125
  %160 = vmatprep.subr.mxu0 0.0
  %161 = vmatpush1.msra.mxu0 %v126
  %162 = vmatprep.subr.mxu0 0.0
  %163 = vmatpush1.msra.mxu0 %v127
  %164 = vmatprep.subr.mxu0 0.0
  %165 = vmatpush1.msra.mxu0 %v128
  %166 = vmatprep.subr.mxu0 0.0
  %167 = vmatpush1.msra.mxu0 %v129
  %168 = vmatprep.subr.mxu0 0.0
  %169 = vmatpush1.msra.mxu0 %v130
  %170 = vmatprep.subr.mxu0 0.0
  %171 = vmatpush1.msra.mxu0 0.0
  %172 = vmatprep.subr.mxu0 0.0
  %173 = vmatpush1.msra.mxu0 0.0
  %174 = vmatprep.subr.mxu0 0.0
  %175 = vmatpush1.msra.mxu0 0.0
  %176 = vmatprep.subr.mxu0 0.0
  %177 = vmatpush1.msra.mxu0 0.0
  %178 = vmatprep.subr.mxu0 0.0
  %179 = vmatpush1.msra.mxu0 0.0
  %180 = vmatprep.subr.mxu0 0.0
  %181 = vmatpush1.msra.mxu0 0.0
  %182 = vmatprep.subr.mxu0 0.0
  %183 = vmatpush1.msra.mxu0 0.0
  %184 = vmatprep.subr.mxu0 0.0
  %185 = vmatpush1.msra.mxu0 0.0
  %186 = vmatprep.subr.mxu0 0.0
  %187 = vmatpush1.msra.mxu0 0.0
  %188 = vmatprep.subr.mxu0 0.0
  %189 = vmatpush1.msra.mxu0 0.0
  %190 = vmatprep.subr.mxu0 0.0
  %191 = vmatpush1.msra.mxu0 0.0
  %192 = vmatprep.subr.mxu0 0.0
  %193 = vmatpush1.msra.mxu0 0.0
  %194 = vmatprep.subr.mxu0 0.0
  %195 = vmatpush1.msra.mxu0 0.0
  %196 = vmatprep.subr.mxu0 0.0
  %197 = vmatpush1.msra.mxu0 0.0
  %198 = vmatprep.subr.mxu0 0.0
  %199 = vmatpush1.msra.mxu0 0.0
  %200 = vmatprep.subr.mxu0 0.0
  %201 = vmatpush1.msra.mxu0 0.0
  %202 = vmatprep.mubr.f32.mxu0 0.0
  %203 = vmatmul.mubr.f32.gmra.mrb[0].mxu0 %v114
  %v204 = vpop.f32.mrb[0].mxu0
  %v205 = vadd.f32 %v136, %v204
  %v206 = vpop.f32.mrb[0].mxu0
  %207 = vdwg.mxu0
  %v208 = vlaneseq
  %v209 = vand.u32 %v208, 127
  %vm210 = vcmp.lt.s32.totalorder %v209, 2
  %vm211 = vcmp.eq.s32.totalorder %v209, 2
  %v212 = vsel %vm210, %v205, 0.0
  %213 = vadd.xlane.f32.xlu0 %v212
  %v214 = vpop.xlane.xlu0 %213
  %v215 = vsel %vm211, %v205, 0.0
  %216 = vadd.xlane.f32.xlu0 %v215
  %v217 = vpop.xlane.xlu0 %216
  %v218 = vmul.f32 %v214, 0.5
  %v219 = vadd.f32 %v205, %v217
  %v220 = vsub.f32 %v219, %v218
  %221 = vst [vmem:[%s5] sm:$0xff] %v220
  // Predicated region
  $region22: #{vanet_forward.1} parent=0 // pred_check
    _
  $region23: #{vanet_forward.1} parent=0 // pred_check_branch
    %223 = sbr.rel (0) target = $region25
  $region24: #{vanet_forward.1} parent=0 // pred_region
    _
  $region25: #{vanet_forward.1} parent=0 // pred_fallthru
    _
  // Predicated region
  $region26: #{vanet_forward.1} parent=0 // pred_check
    _
  $region27: #{vanet_forward.1} parent=0 // pred_check_branch
    %225 = sbr.rel (0) target = $region29
  $region28: #{vanet_forward.1} parent=0 // pred_region
    _
  $region29: #{vanet_forward.1} parent=0 // pred_fallthru
    _

</llo_original>
